<compile_context>
chip_gen: v5e
topology: v5e:2x2
jax: 0.10.0
libtpu: 0.0.40
codegen_flags: <defaults>
</compile_context>

<pallas_src>
import math

import jax
import jax.numpy as jnp
from jax.experimental import pallas as pl
from jax.experimental.pallas import tpu as pltpu


# ----------------------------------------------------------------------------
# Kernel: broadcast-add of the positional table over the batch axis.
#   x_ref/o_ref: (ts, B, D)   pe_ref: (ts, 1, D)
# ----------------------------------------------------------------------------
def _pe_add_kernel(x_ref, pe_ref, o_ref):
    # (ts, 1, D) broadcasts over the batch (sublane) axis — native sublane broadcast.
    o_ref[...] = x_ref[...] + pe_ref[...]


def _choose_seq_tile(seq_len, row_bytes, budget_bytes):
    """Largest seq tile whose x-block fits the VMEM budget.

    Prefers multiple-of-8 divisors of seq_len (sublane friendly); falls back to
    any divisor, then to the full sequence in one block.
    """
    max_rows = max(1, budget_bytes // max(row_bytes, 1))
    if seq_len <= max_rows:
        return seq_len
    for t in range((max_rows // 8) * 8, 7, -8):
        if seq_len % t == 0:
            return t
    for t in range(max_rows, 0, -1):
        if seq_len % t == 0:
            return t
    return seq_len


def positional_encoding(x_sbd, pe_buffer, *, max_block_bytes=4 << 20):
    """PositionalEncoding.forward (eval mode).

    x_sbd:     [seq_len, batch, d_model]
    pe_buffer: [max_len, 1, d_model]  (same layout as the registered torch buffer)
    """
    S, B, D = x_sbd.shape
    pe = pe_buffer[:S]                                   # (S, 1, D), static slice

    ts = _choose_seq_tile(S, B * D * x_sbd.dtype.itemsize, max_block_bytes)
    grid = (S // ts,)

    return pl.pallas_call(
        _pe_add_kernel,
        out_shape=jax.ShapeDtypeStruct((S, B, D), x_sbd.dtype),
        grid=grid,
        in_specs=[
            pl.BlockSpec((ts, B, D), lambda i: (i, 0, 0)),   # last two dims = full (B, D)
            pl.BlockSpec((ts, 1, D), lambda i: (i, 0, 0)),
        ],
        out_specs=pl.BlockSpec((ts, B, D), lambda i: (i, 0, 0)),
        compiler_params=pltpu.CompilerParams(
            dimension_semantics=("parallel",)),
    )(x_sbd, pe)
    # TODO(synk): in a full transformer this add should be fused into the first
    # encoder-layer kernel to avoid the standalone HBM round trip entirely.


# ----------------------------------------------------------------------------
# Positional table construction (matches the PyTorch buffer exactly).
# ----------------------------------------------------------------------------
def make_pe(max_len, d_model, dtype=jnp.float32):
    position = jnp.arange(max_len, dtype=jnp.float32)[:, None]
    div_term = jnp.exp(jnp.arange(0, d_model, 2, dtype=jnp.float32)
                       * (-math.log(10000.0) / d_model))
    pe = jnp.zeros((max_len, d_model), dtype=jnp.float32)
    pe = pe.at[:, 0::2].set(jnp.sin(position * div_term))
    pe = pe.at[:, 1::2].set(jnp.cos(position * div_term))
    return pe[:, None, :].astype(dtype)                   # (max_len, 1, d_model)


if __name__ == "__main__":
    SEQ, BATCH, D_MODEL, MAX_LEN = 8, 2, 32, 5000

    k1, k2 = jax.random.split(jax.random.PRNGKey(0))

    # --- module-sized test (tiny shapes, single grid step) ---
    x = jax.random.normal(k1, (SEQ, BATCH, D_MODEL), dtype=jnp.float32)
    pe = make_pe(MAX_LEN, D_MODEL)

    out = jax.block_until_ready(positional_encoding(x, pe))
    ref = x + pe[:SEQ]
    assert out.shape == (SEQ, BATCH, D_MODEL)
    assert jnp.allclose(out, ref, atol=1e-6, rtol=1e-6)

    # --- lane-dense, multi-tile configuration (d_model multiple of 128, grid > 1) ---
    S2, B2, D2 = 640, 4, 128
    x2 = jax.random.normal(k2, (S2, B2, D2), dtype=jnp.float32)
    pe2 = make_pe(1024, D2)
    out2 = jax.block_until_ready(
        positional_encoding(x2, pe2, max_block_bytes=256 * 1024))
    ref2 = x2 + pe2[:S2]
    assert jnp.allclose(out2, ref2, atol=1e-6, rtol=1e-6)

    print("KERNEL_OK")
</pallas_src>

<mosaic_0001>
module attributes {stable_mosaic.version = 11 : i64} {
  func.func @_pe_add_kernel(%arg0: i32, %arg1: memref<8x2x32xf32, #tpu.memory_space<vmem>>, %arg2: memref<8x1x32xf32, #tpu.memory_space<vmem>>, %arg3: memref<8x2x32xf32, #tpu.memory_space<vmem>>) attributes {dimension_semantics = [#tpu.dimension_semantics<parallel>], iteration_bounds = array<i64: 1>, scalar_prefetch = 0 : i64, scratch_operands = 0 : i64, tpu.core_type = #tpu.core_type<tc>, window_params = [{transform_indices = @transform_0, window_bounds = array<i64: 8, 2, 32>}, {transform_indices = @transform_1, window_bounds = array<i64: 8, 1, 32>}, {transform_indices = @transform_2, window_bounds = array<i64: 8, 2, 32>}]} {
    %c0 = arith.constant 0 : index
    %c0_0 = arith.constant 0 : index
    %c0_1 = arith.constant 0 : index
    %0 = vector.load %arg1[%c0, %c0_0, %c0_1] : memref<8x2x32xf32, #tpu.memory_space<vmem>>, vector<8x2x32xf32>
    %c0_2 = arith.constant 0 : index
    %c0_3 = arith.constant 0 : index
    %c0_4 = arith.constant 0 : index
    %1 = vector.load %arg2[%c0_2, %c0_3, %c0_4] : memref<8x1x32xf32, #tpu.memory_space<vmem>>, vector<8x1x32xf32>
    %2 = vector.broadcast %1 : vector<8x1x32xf32> to vector<8x2x32xf32>
    %3 = arith.addf %0, %2 : vector<8x2x32xf32>
    %c0_5 = arith.constant 0 : index
    %c0_6 = arith.constant 0 : index
    %c0_7 = arith.constant 0 : index
    %4 = vector.load %arg3[%c0_5, %c0_6, %c0_7] : memref<8x2x32xf32, #tpu.memory_space<vmem>>, vector<8x2x32xf32>
    tpu.vector_store %arg3[%c0_5, %c0_6, %c0_7], %3 {strides = array<i32>} : memref<8x2x32xf32, #tpu.memory_space<vmem>>, vector<8x2x32xf32>,
    return
  }
  func.func @transform_0(%arg0: i32) -> (i32, i32, i32) {
    %c0_i32 = arith.constant 0 : i32
    %c0_i32_0 = arith.constant 0 : i32
    %c0_i32_1 = arith.constant 0 : i32
    return %arg0, %c0_i32, %c0_i32_0 : i32, i32, i32
  }
  func.func @transform_1(%arg0: i32) -> (i32, i32, i32) {
    %c0_i32 = arith.constant 0 : i32
    %c0_i32_0 = arith.constant 0 : i32
    %c0_i32_1 = arith.constant 0 : i32
    return %arg0, %c0_i32, %c0_i32_0 : i32, i32, i32
  }
  func.func @transform_2(%arg0: i32) -> (i32, i32, i32) {
    %c0_i32 = arith.constant 0 : i32
    %c0_i32_0 = arith.constant 0 : i32
    %c0_i32_1 = arith.constant 0 : i32
    return %arg0, %c0_i32, %c0_i32_0 : i32, i32, i32
  }
}

</mosaic_0001>

<llo_original>
// kernel: tpu_custom_call.1
$region0: #{tpu_custom_call.1}
  #allocation0 [shape = 'u32[]', space=smem, size = 0x4, offset = 0x4, fixed_abs, tag = 'smem constant byte address 0x4 - core index']
  #allocation1 [shape = 'u32[72,128]{1,0:T(1,128)}', space=vmem, size = 0x9000, scoped, tag = 'internal scratch']
  %s0 = inlined_call_operand.hbm [shape: f32[8,2,32], index: 0, kind: input, shape index: {}]
  %s1 = inlined_call_operand.hbm [shape: f32[8,1,32], index: 1, kind: input, shape index: {}]
  %s2 = inlined_call_operand.hbm [shape: f32[8,2,32], index: 2, kind: output, shape index: {}]
  %s3 = sld [smem:[#allocation0]]
  $region26: #{tpu_custom_call.1} parent=0
    _
  %s5 = ssub.s32 1, %s3
  %s6 = scalar_select 0, %s5, %s3
  $region1: #{tpu_custom_call.1} parent=0
    #allocation2 [shape = 'u8[8192]{0}', space=vmem, size = 0x2000, scoped, tag = 'input window, operand 0, single buffered']
    #allocation3 [shape = 's32[1]{0}', space=sflag, size = 0x4, scoped, tag = 'scoped memory for tpu_custom_call.1']
    #allocation4 [shape = 's32[1]{0}', space=sflag, size = 0x4, scoped, tag = 'scoped memory for tpu_custom_call.1']
    #allocation5 [shape = 'u8[4096]{0}', space=vmem, size = 0x1000, scoped, tag = 'input window, operand 1, single buffered']
    #allocation6 [shape = 's32[1]{0}', space=sflag, size = 0x4, scoped, tag = 'scoped memory for tpu_custom_call.1']
    #allocation7 [shape = 'u8[8192]{0}', space=vmem, size = 0x2000, scoped, tag = 'output window, operand 0, single buffered']
    %7 = vsyncpa [#allocation3], 0
    %8 = vsyncpa [#allocation6], 0
    %9 = vsyncpa [#allocation4], 0
    // Predicated region
    $region2: #{tpu_custom_call.1} parent=1 // pred_check
      _
    $region3: #{tpu_custom_call.1} parent=1 // pred_check_branch
      %11 = sbr.rel (0) target = $region5
    $region4: #{tpu_custom_call.1} parent=1 // pred_region
      %13 = vsyncadd [#allocation3], 0
      %s14 = sshll.u32 %s0, 4
      %s15 = int_to_ptr.hbm [resolvable:$true] %s14
      %s16 = sshll.u32 [#allocation2], 4
      %s17 = int_to_ptr.vmem [resolvable:$true] %s16
      %22 = dma.hbm_to_vmem [thread:$0]  %s15, 256, %s17, [#allocation3], 32, 32, 2
    $region5: #{tpu_custom_call.1} parent=1 // pred_fallthru
      _
    // Predicated region
    $region6: #{tpu_custom_call.1} parent=1 // pred_check
      _
    $region7: #{tpu_custom_call.1} parent=1 // pred_check_branch
      %24 = sbr.rel (0) target = $region9
    $region8: #{tpu_custom_call.1} parent=1 // pred_region
      %26 = vsyncadd [#allocation6], 0
      %s27 = sshll.u32 %s1, 4
      %s28 = int_to_ptr.hbm [resolvable:$true] %s27
      %s29 = sshll.u32 [#allocation5], 4
      %s30 = int_to_ptr.vmem [resolvable:$true] %s29
      %35 = dma.hbm_to_vmem [thread:$0]  %s28, 128, %s30, [#allocation6], 16, 16, 1
    $region9: #{tpu_custom_call.1} parent=1 // pred_fallthru
      _
    // Predicated region
    $region10: #{tpu_custom_call.1} parent=1 // pred_check
      _
    $region11: #{tpu_custom_call.1} parent=1 // pred_check_branch
      %37 = sbr.rel (0) target = $region13
    $region12: #{tpu_custom_call.1} parent=1 // pred_region
      %39 = dma.done [#allocation3], 256
    $region13: #{tpu_custom_call.1} parent=1 // pred_fallthru
      _
    // Predicated region
    $region14: #{tpu_custom_call.1} parent=1 // pred_check
      _
    $region15: #{tpu_custom_call.1} parent=1 // pred_check_branch
      %41 = sbr.rel (0) target = $region17
    $region16: #{tpu_custom_call.1} parent=1 // pred_region
      %43 = dma.done [#allocation6], 128
    $region17: #{tpu_custom_call.1} parent=1 // pred_fallthru
      _
    %v44 = vld [vmem:[#allocation2] sm:$0x3]
    %v45 = vld [vmem:[#allocation2 + $0x2] sm:$0x3]
    %v46 = vld [vmem:[#allocation2 + $0x4] sm:$0x3]
    %v47 = vld [vmem:[#allocation2 + $0x6] sm:$0x3]
    %v48 = vld [vmem:[#allocation2 + $0x8] sm:$0x3]
    %v49 = vld [vmem:[#allocation2 + $0xa] sm:$0x3]
    %v50 = vld [vmem:[#allocation2 + $0xc] sm:$0x3]
    %v51 = vld [vmem:[#allocation2 + $0xe] sm:$0x3]
    %v52 = vld [vmem:[#allocation5] sm:$0x1]
    %v53 = vld [vmem:[#allocation5 + $0x1] sm:$0x1]
    %v54 = vld [vmem:[#allocation5 + $0x2] sm:$0x1]
    %v55 = vld [vmem:[#allocation5 + $0x3] sm:$0x1]
    %v56 = vld [vmem:[#allocation5 + $0x4] sm:$0x1]
    %v57 = vld [vmem:[#allocation5 + $0x5] sm:$0x1]
    %v58 = vld [vmem:[#allocation5 + $0x6] sm:$0x1]
    %v59 = vld [vmem:[#allocation5 + $0x7] sm:$0x1]
    %v68 = vperm.slane %v52, 0
    %v69 = vperm.slane %v53, 0
    %v70 = vperm.slane %v54, 0
    %v71 = vperm.slane %v55, 0
    %v72 = vperm.slane %v56, 0
    %v73 = vperm.slane %v57, 0
    %v74 = vperm.slane %v58, 0
    %v75 = vperm.slane %v59, 0
    %v84 = vadd.f32 %v44, %v68
    %v85 = vadd.f32 %v45, %v69
    %v86 = vadd.f32 %v46, %v70
    %v87 = vadd.f32 %v47, %v71
    %v88 = vadd.f32 %v48, %v72
    %v89 = vadd.f32 %v49, %v73
    %v90 = vadd.f32 %v50, %v74
    %v91 = vadd.f32 %v51, %v75
    %vm92 = vcmask 254976
    %93 = vst.msk [vmem:[#allocation7] sm:$0x3] %vm92, %v84
    %94 = vst.msk [vmem:[#allocation7 + $0x2] sm:$0x3] %vm92, %v85
    %95 = vst.msk [vmem:[#allocation7 + $0x4] sm:$0x3] %vm92, %v86
    %96 = vst.msk [vmem:[#allocation7 + $0x6] sm:$0x3] %vm92, %v87
    %97 = vst.msk [vmem:[#allocation7 + $0x8] sm:$0x3] %vm92, %v88
    %98 = vst.msk [vmem:[#allocation7 + $0xa] sm:$0x3] %vm92, %v89
    %99 = vst.msk [vmem:[#allocation7 + $0xc] sm:$0x3] %vm92, %v90
    %100 = vst.msk [vmem:[#allocation7 + $0xe] sm:$0x3] %vm92, %v91
    // Predicated region
    $region18: #{tpu_custom_call.1} parent=1 // pred_check
      _
    $region19: #{tpu_custom_call.1} parent=1 // pred_check_branch
      %102 = sbr.rel (0) target = $region21
    $region20: #{tpu_custom_call.1} parent=1 // pred_region
      %104 = vsyncadd [#allocation4], 0
      %s105 = sshll.u32 [#allocation7], 4
      %s106 = int_to_ptr.vmem [resolvable:$true] %s105
      %s107 = sshll.u32 %s2, 4
      %s108 = int_to_ptr.hbm [resolvable:$true] %s107
      %113 = dma.vmem_to_hbm [thread:$0]  %s106, 256, %s108, [#allocation4], 32, 32, 2
    $region21: #{tpu_custom_call.1} parent=1 // pred_fallthru
      _
    // Predicated region
    $region22: #{tpu_custom_call.1} parent=1 // pred_check
      _
    $region23: #{tpu_custom_call.1} parent=1 // pred_check_branch
      %115 = sbr.rel (0) target = $region25
    $region24: #{tpu_custom_call.1} parent=1 // pred_region
      %117 = dma.done [#allocation4], 256
    $region25: #{tpu_custom_call.1} parent=1 // pred_fallthru
      _
    %118 = vsyncpa [#allocation3], 1
    %119 = vsyncpa [#allocation6], 1
    %120 = vsyncpa [#allocation4], 1

</llo_original>
